<compile_context>
chip_gen: v5e
topology: v5e:2x2
jax: 0.10.0
libtpu: 0.0.40
codegen_flags: <defaults>
</compile_context>

<pallas_src>
import functools

import jax
import jax.numpy as jnp
from jax.experimental import pallas as pl
from jax.experimental.pallas import tpu as pltpu

_MIB = 1024 * 1024


# ---------------------------------------------------------------------------
# Small helpers shared by both kernels (all operate on tiny (1, W) values).
# ---------------------------------------------------------------------------

def _fold_sum(v, k, f):
    """Sum the k lane segments of a (1, k*f) array down to (1, f)."""
    if k == 1:
        return v
    out = v[:, 0:f]
    for j in range(1, k):
        out = out + v[:, j * f:(j + 1) * f]
    return out


def _tile_lanes(v, k):
    """Tile a (1, f) array k times along lanes -> (1, k*f)."""
    if k == 1:
        return v
    return jnp.tile(v, (1, k))


def _combine_feature_stats(mu_c, m2_c, *, fold_k, n_feat, rows_per_col, n_rows):
    """Chan-combine per-column (mean, M2) into per-feature mean / unbiased var."""
    mu_sum = _fold_sum(mu_c, fold_k, n_feat)                  # (1, F)
    mean = mu_sum * (1.0 / fold_k)
    m2 = _fold_sum(m2_c, fold_k, n_feat)
    if fold_k > 1:
        mu2_sum = _fold_sum(mu_c * mu_c, fold_k, n_feat)
        m2 = m2 + rows_per_col * (mu2_sum - fold_k * mean * mean)
    if n_rows > 1:
        var = m2 * (1.0 / (n_rows - 1))
    else:
        # PyTorch: unbiased var of a single sample is NaN -> update skipped.
        var = jnp.full_like(mean, jnp.nan)
    return mean, var


def _update_buffers_and_beta(mean, var, rm, rv, *, momentum, beta_max):
    """Momentum update (gated on NaN-free var) + beta / 1/beta per feature."""
    nan_count = jnp.sum((var != var).astype(jnp.int32))
    do_update = nan_count == 0
    new_rm = jnp.where(do_update, (1.0 - momentum) * rm + momentum * mean, rm)
    new_rv = jnp.where(do_update, (1.0 - momentum) * rv + momentum * var, rv)
    b = jnp.clip(new_rm - new_rv, 0.001, beta_max)
    inv_b = pl.reciprocal(b, approx=False)
    return new_rm, new_rv, b, inv_b


# ---------------------------------------------------------------------------
# Kernel 1: single-pass fast path (whole folded problem lives in VMEM).
# ---------------------------------------------------------------------------

def _single_pass_kernel(x_ref, t_ref, rm_ref, rv_ref,
                        loss_ref, new_rm_ref, new_rv_ref,
                        *, momentum, beta_max, size_average,
                        n_rows, n_feat, fold_k):
    x = x_ref[...].astype(jnp.float32)              # (N/k, k*F)
    t = t_ref[...].astype(jnp.float32)
    n = jnp.abs(x - t)

    rows = n.shape[0]                               # = n_rows // fold_k
    mu_c = jnp.sum(n, axis=0, keepdims=True) * (1.0 / rows)
    d = n - mu_c
    m2_c = jnp.sum(d * d, axis=0, keepdims=True)

    mean, var = _combine_feature_stats(
        mu_c, m2_c, fold_k=fold_k, n_feat=n_feat,
        rows_per_col=float(rows), n_rows=n_rows)

    new_rm, new_rv, b, inv_b = _update_buffers_and_beta(
        mean, var, rm_ref[...], rv_ref[...],
        momentum=momentum, beta_max=beta_max)
    new_rm_ref[...] = new_rm
    new_rv_ref[...] = new_rv

    bt = _tile_lanes(b, fold_k)                     # (1, k*F)
    ibt = _tile_lanes(inv_b, fold_k)
    l = jnp.where(n < bt, 0.5 * (n * n) * ibt, n - 0.5 * bt)
    total = jnp.sum(l)
    if size_average:
        total = total * (1.0 / float(n_rows * n_feat))
    loss_ref[0, 0] = total


# ---------------------------------------------------------------------------
# Kernel 2: two-pass tiled path  grid = (pass, batch tile).
#   pass 0: shifted per-column sum / sumsq accumulation
#   pass 1: finalize stats + buffers + beta, accumulate loss, reduce to scalar
# ---------------------------------------------------------------------------

def _two_pass_kernel(x_ref, t_ref, rm_ref, rv_ref,
                     loss_ref, new_rm_ref, new_rv_ref,
                     shift_ref, sum_ref, sumsq_ref,
                     beta_ref, inv_beta_ref, lpart_ref,
                     *, momentum, beta_max, size_average,
                     n_rows, n_feat, fold_k, tile_rows, num_tiles, needs_mask):
    p = pl.program_id(0)            # 0 = stats pass, 1 = loss pass
    i = pl.program_id(1)            # batch-tile index
    is_stats = p == 0
    is_loss = p == 1
    is_first = i == 0
    is_last = i == num_tiles - 1

    x = x_ref[...].astype(jnp.float32)              # (TN, k*F)
    t = t_ref[...].astype(jnp.float32)
    n = jnp.abs(x - t)

    n_rows_folded = n_rows // fold_k

    if needs_mask:
        row = i * tile_rows + jax.lax.broadcasted_iota(
            jnp.int32, (tile_rows, 1), 0)
        valid = row < n_rows_folded                 # (TN, 1)
    else:
        valid = None

    # ---- pass 0, first tile: pick per-column shift, zero accumulators ------
    @pl.when(jnp.logical_and(is_stats, is_first))
    def _init_stats():
        # Tile 0 is never ragged (guaranteed by the wrapper).  The shift only
        # needs to approximate the per-column mean: it controls conditioning
        # of the variance, not correctness.
        shift_ref[...] = jnp.sum(n, axis=0, keepdims=True) * (1.0 / tile_rows)
        sum_ref[...] = jnp.zeros_like(sum_ref)
        sumsq_ref[...] = jnp.zeros_like(sumsq_ref)

    def _accum_stats(masked):
        d = n - shift_ref[...]
        if masked:
            d = jnp.where(valid, d, 0.0)
        sum_ref[...] += jnp.sum(d, axis=0, keepdims=True)
        sumsq_ref[...] += jnp.sum(d * d, axis=0, keepdims=True)

    # ---- pass 1, first tile: finalize stats, update buffers, build beta ----
    @pl.when(jnp.logical_and(is_loss, is_first))
    def _finalize_stats():
        rows_per_col = float(n_rows_folded)
        sh = shift_ref[...]
        s = sum_ref[...]
        q = sumsq_ref[...]
        mu_c = sh + s * (1.0 / rows_per_col)                 # per-column mean
        m2_c = q - (s * s) * (1.0 / rows_per_col)            # per-column M2
        mean, var = _combine_feature_stats(
            mu_c, m2_c, fold_k=fold_k, n_feat=n_feat,
            rows_per_col=rows_per_col, n_rows=n_rows)
        new_rm, new_rv, b, inv_b = _update_buffers_and_beta(
            mean, var, rm_ref[...], rv_ref[...],
            momentum=momentum, beta_max=beta_max)
        new_rm_ref[...] = new_rm
        new_rv_ref[...] = new_rv
        beta_ref[...] = _tile_lanes(b, fold_k)
        inv_beta_ref[...] = _tile_lanes(inv_b, fold_k)
        lpart_ref[...] = jnp.zeros_like(lpart_ref)

    def _accum_loss(masked):
        b = beta_ref[...]                            # (1, W) -> implicit bcast
        ib = inv_beta_ref[...]
        l = jnp.where(n < b, 0.5 * (n * n) * ib, n - 0.5 * b)
        if masked:
            l = jnp.where(valid, l, 0.0)
        lpart_ref[...] += jnp.sum(l, axis=0, keepdims=True)

    # Ragged-row mask is paid only on the LAST batch tile.
    if needs_mask:
        not_last = jnp.logical_not(is_last)
        pl.when(jnp.logical_and(is_stats, not_last))(lambda: _accum_stats(False))
        pl.when(jnp.logical_and(is_stats, is_last))(lambda: _accum_stats(True))
        pl.when(jnp.logical_and(is_loss, not_last))(lambda: _accum_loss(False))
        pl.when(jnp.logical_and(is_loss, is_last))(lambda: _accum_loss(True))
    else:
        pl.when(is_stats)(lambda: _accum_stats(False))
        pl.when(is_loss)(lambda: _accum_loss(False))

    # ---- pass 1, last tile: reduce per-column partials to the scalar loss --
    @pl.when(jnp.logical_and(is_loss, is_last))
    def _finalize_loss():
        total = jnp.sum(lpart_ref[...])
        if size_average:
            total = total * (1.0 / float(n_rows * n_feat))
        loss_ref[0, 0] = total


# ---------------------------------------------------------------------------
# Wrapper: layout (lane folding), per-generation budgets, path dispatch.
# ---------------------------------------------------------------------------

def _vmem_capacity_bytes():
    try:
        info = pltpu.get_tpu_info()
        cap = getattr(info, "vmem_capacity_bytes", None)
        if cap:
            return int(cap)
    except Exception:
        pass
    return 64 * _MIB        # conservative default (v7x-class per-core VMEM)


def _vmem_limit_bytes():
    cap = _vmem_capacity_bytes()
    if cap <= 64 * _MIB:    # v7x-class: 64 MiB physical -> leave headroom
        return 40 * _MIB
    return 64 * _MIB        # v5e / v6e: 128 MiB physical


def _max_tile_rows(width, x_itemsize, t_itemsize, vmem_limit):
    """Largest tile height (multiple of 8) whose working set fits the budget.

    Per streamed row: 2 double-buffered copies of each input block plus ~3
    full-tile f32 temporaries (n, centered/selected values) on the compute side.
    """
    per_row = width * (2 * (x_itemsize + t_itemsize) + 3 * 4)
    rows = (vmem_limit - 8 * _MIB) // max(per_row, 1)
    return max(8, (rows // 8) * 8)


@functools.partial(
    jax.jit,
    static_argnames=("momentum", "beta", "size_average", "tile_rows"))
def adjust_smooth_l1_loss(inputs, target, running_mean, running_var, *,
                          momentum=0.1, beta=1.0 / 9, size_average=True,
                          tile_rows=None):
    """Returns (scalar loss, updated running_mean, updated running_var).

    `tile_rows` (optional) forces the two-pass tiled path with the given tile
    height, measured in *folded* rows (rows of the lane-packed layout).
    """
    N, F = inputs.shape
    assert target.shape == (N, F)

    # Lane folding: for narrow F pack k = 128 // F consecutive rows into the
    # lane dimension so every vreg lane is used.
    fold_k = 1
    if F < 128 and 128 % F == 0:
        k0 = 128 // F
        if N % k0 == 0:
            fold_k = k0
    width = fold_k * F
    n_rows_folded = N // fold_k

    if fold_k > 1:
        xw = inputs.reshape(n_rows_folded, width)   # contiguous -> free reshape
        tw = target.reshape(n_rows_folded, width)
    else:
        xw, tw = inputs, target

    rm = running_mean.reshape(1, F).astype(jnp.float32)
    rv = running_var.reshape(1, F).astype(jnp.float32)

    vmem_limit = _vmem_limit_bytes()
    max_rows = _max_tile_rows(width, xw.dtype.itemsize, tw.dtype.itemsize,
                              vmem_limit)

    out_shape = (jax.ShapeDtypeStruct((1, 1), jnp.float32),
                 jax.ShapeDtypeStruct((1, F), jnp.float32),
                 jax.ShapeDtypeStruct((1, F), jnp.float32))

    use_single_pass = (tile_rows is None) and (n_rows_folded <= max_rows)

    if use_single_pass:
        kernel = functools.partial(
            _single_pass_kernel, momentum=momentum, beta_max=beta,
            size_average=size_average, n_rows=N, n_feat=F, fold_k=fold_k)
        loss, new_rm, new_rv = pl.pallas_call(
            kernel,
            out_shape=out_shape,
            grid=(1,),
            in_specs=[pl.BlockSpec((n_rows_folded, width), lambda i: (0, 0)),
                      pl.BlockSpec((n_rows_folded, width), lambda i: (0, 0)),
                      pl.BlockSpec((1, F), lambda i: (0, 0)),
                      pl.BlockSpec((1, F), lambda i: (0, 0))],
            out_specs=(pl.BlockSpec(memory_space=pltpu.MemorySpace.SMEM),
                       pl.BlockSpec((1, F), lambda i: (0, 0)),
                       pl.BlockSpec((1, F), lambda i: (0, 0))),
            input_output_aliases={2: 1, 3: 2},
            compiler_params=pltpu.CompilerParams(
                dimension_semantics=("arbitrary",),
                vmem_limit_bytes=vmem_limit),
        )(xw, tw, rm, rv)
        return loss[0, 0], new_rm.reshape(F), new_rv.reshape(F)

    # ---- two-pass tiled path -------------------------------------------------
    tn = tile_rows if tile_rows is not None else max_rows
    tn = min(tn, n_rows_folded)
    if tn < n_rows_folded:
        tn = max(8, (tn // 8) * 8)          # (8, 128) sublane constraint
    num_tiles = pl.cdiv(n_rows_folded, tn)
    needs_mask = (n_rows_folded % tn) != 0

    kernel = functools.partial(
        _two_pass_kernel, momentum=momentum, beta_max=beta,
        size_average=size_average, n_rows=N, n_feat=F, fold_k=fold_k,
        tile_rows=tn, num_tiles=num_tiles, needs_mask=needs_mask)

    loss, new_rm, new_rv = pl.pallas_call(
        kernel,
        out_shape=out_shape,
        grid=(2, num_tiles),                # (pass, batch tile)
        in_specs=[pl.BlockSpec((tn, width), lambda p, i: (i, 0)),
                  pl.BlockSpec((tn, width), lambda p, i: (i, 0)),
                  pl.BlockSpec((1, F), lambda p, i: (0, 0)),
                  pl.BlockSpec((1, F), lambda p, i: (0, 0))],
        out_specs=(pl.BlockSpec(memory_space=pltpu.MemorySpace.SMEM),
                   pl.BlockSpec((1, F), lambda p, i: (0, 0)),
                   pl.BlockSpec((1, F), lambda p, i: (0, 0))),
        scratch_shapes=[pltpu.VMEM((1, width), jnp.float32)] * 6,
        input_output_aliases={2: 1, 3: 2},
        compiler_params=pltpu.CompilerParams(
            dimension_semantics=("arbitrary", "arbitrary"),
            vmem_limit_bytes=vmem_limit),
    )(xw, tw, rm, rv)

    return loss[0, 0], new_rm.reshape(F), new_rv.reshape(F)


# ---------------------------------------------------------------------------
# Pure-JAX reference (port of the PyTorch forward) + self-test.
# ---------------------------------------------------------------------------

def _reference(inputs, target, running_mean, running_var,
               momentum=0.1, beta_max=1.0 / 9, size_average=True):
    n = jnp.abs(inputs.astype(jnp.float32) - target.astype(jnp.float32))
    mean = n.mean(axis=0)
    var = n.var(axis=0, ddof=1)
    do_update = jnp.sum(jnp.isnan(var)) == 0
    new_rm = jnp.where(do_update,
                       (1 - momentum) * running_mean + momentum * mean,
                       running_mean)
    new_rv = jnp.where(do_update,
                       (1 - momentum) * running_var + momentum * var,
                       running_var)
    b = jnp.clip(new_rm - new_rv, 0.001, beta_max)[None, :]
    b = jnp.broadcast_to(b, n.shape)
    loss = jnp.where(n < b, 0.5 * n ** 2 / b, n - 0.5 * b)
    out = loss.mean() if size_average else loss.sum()
    return out, new_rm, new_rv


if __name__ == "__main__":
    momentum = 0.1
    beta = 1.0 / 9
    base_key = jax.random.PRNGKey(0)

    def check(name, N, F, size_average, tile_rows, salt):
        k1, k2 = jax.random.split(jax.random.fold_in(base_key, salt))
        x = jax.random.normal(k1, (N, F), dtype=jnp.float32)
        t = jax.random.normal(k2, (N, F), dtype=jnp.float32)
        rm = jnp.full((F,), beta, dtype=jnp.float32)     # buffer init = beta
        rv = jnp.zeros((F,), dtype=jnp.float32)
        loss, nrm, nrv = adjust_smooth_l1_loss(
            x, t, rm, rv, momentum=momentum, beta=beta,
            size_average=size_average, tile_rows=tile_rows)
        jax.block_until_ready((loss, nrm, nrv))
        ref_loss, ref_rm, ref_rv = _reference(
            x, t, rm, rv, momentum, beta, size_average)
        assert jnp.allclose(loss, ref_loss, rtol=1e-5, atol=1e-6), \
            (name, float(loss), float(ref_loss))
        assert jnp.allclose(nrm, ref_rm, rtol=1e-5, atol=1e-6), name
        assert jnp.allclose(nrv, ref_rv, rtol=1e-5, atol=1e-6), name

    # Two-pass tiled path: lane folding (F=32 -> k=4), ragged last tile.
    check("tiled_fold_ragged", N=200, F=32, size_average=True, tile_rows=16, salt=0)
    # Single-pass fast path with lane folding, sum reduction.
    check("single_fold_sum", N=8, F=32, size_average=False, tile_rows=None, salt=1)
    # Single-pass, no folding (F = 128).
    check("single_wide", N=64, F=128, size_average=True, tile_rows=None, salt=2)
    # Two-pass tiled path, no folding, ragged last tile (F not a divisor of 128).
    check("tiled_wide_ragged", N=40, F=160, size_average=True, tile_rows=16, salt=3)

    print("KERNEL_OK")
</pallas_src>

<mosaic_0001>
module attributes {stable_mosaic.version = 11 : i64} {
  func.func @_two_pass_kernel(%arg0: i32, %arg1: i32, %arg2: memref<16x128xf32, #tpu.memory_space<vmem>>, %arg3: memref<16x128xf32, #tpu.memory_space<vmem>>, %arg4: memref<1x32xf32, #tpu.memory_space<vmem>>, %arg5: memref<1x32xf32, #tpu.memory_space<vmem>>, %arg6: memref<1x1xf32, #tpu.memory_space<smem>>, %arg7: memref<1x32xf32, #tpu.memory_space<vmem>>, %arg8: memref<1x32xf32, #tpu.memory_space<vmem>>, %arg9: memref<1x128xf32, #tpu.memory_space<vmem>>, %arg10: memref<1x128xf32, #tpu.memory_space<vmem>>, %arg11: memref<1x128xf32, #tpu.memory_space<vmem>>, %arg12: memref<1x128xf32, #tpu.memory_space<vmem>>, %arg13: memref<1x128xf32, #tpu.memory_space<vmem>>, %arg14: memref<1x128xf32, #tpu.memory_space<vmem>>) attributes {dimension_semantics = [#tpu.dimension_semantics<arbitrary>, #tpu.dimension_semantics<arbitrary>], iteration_bounds = array<i64: 2, 4>, scalar_prefetch = 0 : i64, scratch_operands = 6 : i64, tpu.core_type = #tpu.core_type<tc>, window_params = [{transform_indices = @transform_0, window_bounds = array<i64: 16, 128>}, {transform_indices = @transform_1, window_bounds = array<i64: 16, 128>}, {pipeline_mode = #tpu.pipeline_mode<synchronous>, transform_indices = @transform_2, window_bounds = array<i64: 1, 32>}, {pipeline_mode = #tpu.pipeline_mode<synchronous>, transform_indices = @transform_3, window_bounds = array<i64: 1, 32>}, {transform_indices = @transform_4, window_bounds = array<i64: 1, 1>}, {pipeline_mode = #tpu.pipeline_mode<synchronous>, transform_indices = @transform_5, window_bounds = array<i64: 1, 32>}, {pipeline_mode = #tpu.pipeline_mode<synchronous>, transform_indices = @transform_6, window_bounds = array<i64: 1, 32>}]} {
    %c0_i32 = arith.constant 0 : i32
    %0 = arith.cmpi eq, %arg0, %c0_i32 : i32
    %c1_i32 = arith.constant 1 : i32
    %1 = arith.cmpi eq, %arg0, %c1_i32 : i32
    %c0_i32_0 = arith.constant 0 : i32
    %2 = arith.cmpi eq, %arg1, %c0_i32_0 : i32
    %c3_i32 = arith.constant 3 : i32
    %3 = arith.cmpi eq, %arg1, %c3_i32 : i32
    %c0 = arith.constant 0 : index
    %c0_1 = arith.constant 0 : index
    %4 = vector.load %arg2[%c0, %c0_1] : memref<16x128xf32, #tpu.memory_space<vmem>>, vector<16x128xf32>
    %c0_2 = arith.constant 0 : index
    %c0_3 = arith.constant 0 : index
    %5 = vector.load %arg3[%c0_2, %c0_3] : memref<16x128xf32, #tpu.memory_space<vmem>>, vector<16x128xf32>
    %6 = arith.subf %4, %5 : vector<16x128xf32>
    %7 = math.absf %6 : vector<16x128xf32>
    %c16_i32 = arith.constant 16 : i32
    %8 = arith.muli %arg1, %c16_i32 : i32
    %9 = tpu.iota {dimensions = array<i32: 0>} : vector<16x1xi32>
    %10 = vector.broadcast %8 : i32 to vector<16x1xi32>
    %11 = arith.addi %10, %9 : vector<16x1xi32>
    %c50_i32 = arith.constant 50 : i32
    %12 = vector.broadcast %c50_i32 : i32 to vector<16x1xi32>
    %13 = arith.cmpi slt, %11, %12 : vector<16x1xi32>
    %14 = arith.andi %0, %2 : i1
    %15 = arith.extui %14 : i1 to i32
    %c0_i32_4 = arith.constant 0 : i32
    %16 = arith.cmpi ne, %15, %c0_i32_4 : i32
    scf.if %16 {
      %cst = arith.constant dense<0.000000e+00> : vector<128xf32>
      %36 = vector.multi_reduction <add>, %7, %cst [0] : vector<16x128xf32> to vector<128xf32>
      %37 = vector.shape_cast %36 : vector<128xf32> to vector<1x128xf32>
      %cst_11 = arith.constant 6.250000e-02 : f32
      %38 = vector.broadcast %cst_11 : f32 to vector<1x128xf32>
      %39 = arith.mulf %37, %38 : vector<1x128xf32>
      %c0_12 = arith.constant 0 : index
      %c0_13 = arith.constant 0 : index
      %40 = vector.load %arg9[%c0_12, %c0_13] : memref<1x128xf32, #tpu.memory_space<vmem>>, vector<1x128xf32>
      tpu.vector_store %arg9[%c0_12, %c0_13], %39 {strides = array<i32>} : memref<1x128xf32, #tpu.memory_space<vmem>>, vector<1x128xf32>,
      %cst_14 = arith.constant 0.000000e+00 : f32
      %41 = vector.broadcast %cst_14 : f32 to vector<1x128xf32>
      %c0_15 = arith.constant 0 : index
      %c0_16 = arith.constant 0 : index
      %42 = vector.load %arg10[%c0_15, %c0_16] : memref<1x128xf32, #tpu.memory_space<vmem>>, vector<1x128xf32>
      tpu.vector_store %arg10[%c0_15, %c0_16], %41 {strides = array<i32>} : memref<1x128xf32, #tpu.memory_space<vmem>>, vector<1x128xf32>,
      %cst_17 = arith.constant 0.000000e+00 : f32
      %43 = vector.broadcast %cst_17 : f32 to vector<1x128xf32>
      %c0_18 = arith.constant 0 : index
      %c0_19 = arith.constant 0 : index
      %44 = vector.load %arg11[%c0_18, %c0_19] : memref<1x128xf32, #tpu.memory_space<vmem>>, vector<1x128xf32>
      tpu.vector_store %arg11[%c0_18, %c0_19], %43 {strides = array<i32>} : memref<1x128xf32, #tpu.memory_space<vmem>>, vector<1x128xf32>,
    } else {
    }
    %17 = arith.andi %1, %2 : i1
    %18 = arith.extui %17 : i1 to i32
    %c0_i32_5 = arith.constant 0 : i32
    %19 = arith.cmpi ne, %18, %c0_i32_5 : i32
    scf.if %19 {
      %c0_11 = arith.constant 0 : index
      %c0_12 = arith.constant 0 : index
      %36 = vector.load %arg9[%c0_11, %c0_12] : memref<1x128xf32, #tpu.memory_space<vmem>>, vector<1x128xf32>
      %c0_13 = arith.constant 0 : index
      %c0_14 = arith.constant 0 : index
      %37 = vector.load %arg10[%c0_13, %c0_14] : memref<1x128xf32, #tpu.memory_space<vmem>>, vector<1x128xf32>
      %c0_15 = arith.constant 0 : index
      %c0_16 = arith.constant 0 : index
      %38 = vector.load %arg11[%c0_15, %c0_16] : memref<1x128xf32, #tpu.memory_space<vmem>>, vector<1x128xf32>
      %cst = arith.constant 2.000000e-02 : f32
      %39 = vector.broadcast %cst : f32 to vector<1x128xf32>
      %40 = arith.mulf %37, %39 : vector<1x128xf32>
      %41 = arith.addf %36, %40 : vector<1x128xf32>
      %42 = arith.mulf %37, %37 : vector<1x128xf32>
      %cst_17 = arith.constant 2.000000e-02 : f32
      %43 = vector.broadcast %cst_17 : f32 to vector<1x128xf32>
      %44 = arith.mulf %42, %43 : vector<1x128xf32>
      %45 = arith.subf %38, %44 : vector<1x128xf32>
      %46 = vector.extract_strided_slice %41 {offsets = [0, 0], sizes = [1, 32], strides = [1, 1]} : vector<1x128xf32> to vector<1x32xf32>
      %47 = vector.extract_strided_slice %41 {offsets = [0, 32], sizes = [1, 32], strides = [1, 1]} : vector<1x128xf32> to vector<1x32xf32>
      %48 = arith.addf %46, %47 : vector<1x32xf32>
      %49 = vector.extract_strided_slice %41 {offsets = [0, 64], sizes = [1, 32], strides = [1, 1]} : vector<1x128xf32> to vector<1x32xf32>
      %50 = arith.addf %48, %49 : vector<1x32xf32>
      %51 = vector.extract_strided_slice %41 {offsets = [0, 96], sizes = [1, 32], strides = [1, 1]} : vector<1x128xf32> to vector<1x32xf32>
      %52 = arith.addf %50, %51 : vector<1x32xf32>
      %cst_18 = arith.constant 2.500000e-01 : f32
      %53 = vector.broadcast %cst_18 : f32 to vector<1x32xf32>
      %54 = arith.mulf %52, %53 : vector<1x32xf32>
      %55 = vector.extract_strided_slice %45 {offsets = [0, 0], sizes = [1, 32], strides = [1, 1]} : vector<1x128xf32> to vector<1x32xf32>
      %56 = vector.extract_strided_slice %45 {offsets = [0, 32], sizes = [1, 32], strides = [1, 1]} : vector<1x128xf32> to vector<1x32xf32>
      %57 = arith.addf %55, %56 : vector<1x32xf32>
      %58 = vector.extract_strided_slice %45 {offsets = [0, 64], sizes = [1, 32], strides = [1, 1]} : vector<1x128xf32> to vector<1x32xf32>
      %59 = arith.addf %57, %58 : vector<1x32xf32>
      %60 = vector.extract_strided_slice %45 {offsets = [0, 96], sizes = [1, 32], strides = [1, 1]} : vector<1x128xf32> to vector<1x32xf32>
      %61 = arith.addf %59, %60 : vector<1x32xf32>
      %62 = arith.mulf %41, %41 : vector<1x128xf32>
      %63 = vector.extract_strided_slice %62 {offsets = [0, 0], sizes = [1, 32], strides = [1, 1]} : vector<1x128xf32> to vector<1x32xf32>
      %64 = vector.extract_strided_slice %62 {offsets = [0, 32], sizes = [1, 32], strides = [1, 1]} : vector<1x128xf32> to vector<1x32xf32>
      %65 = arith.addf %63, %64 : vector<1x32xf32>
      %66 = vector.extract_strided_slice %62 {offsets = [0, 64], sizes = [1, 32], strides = [1, 1]} : vector<1x128xf32> to vector<1x32xf32>
      %67 = arith.addf %65, %66 : vector<1x32xf32>
      %68 = vector.extract_strided_slice %62 {offsets = [0, 96], sizes = [1, 32], strides = [1, 1]} : vector<1x128xf32> to vector<1x32xf32>
      %69 = arith.addf %67, %68 : vector<1x32xf32>
      %cst_19 = arith.constant 4.000000e+00 : f32
      %70 = vector.broadcast %cst_19 : f32 to vector<1x32xf32>
      %71 = arith.mulf %70, %54 : vector<1x32xf32>
      %72 = arith.mulf %71, %54 : vector<1x32xf32>
      %73 = arith.subf %69, %72 : vector<1x32xf32>
      %cst_20 = arith.constant 5.000000e+01 : f32
      %74 = vector.broadcast %cst_20 : f32 to vector<1x32xf32>
      %75 = arith.mulf %74, %73 : vector<1x32xf32>
      %76 = arith.addf %61, %75 : vector<1x32xf32>
      %cst_21 = arith.constant 0.00502512557 : f32
      %77 = vector.broadcast %cst_21 : f32 to vector<1x32xf32>
      %78 = arith.mulf %76, %77 : vector<1x32xf32>
      %c0_22 = arith.constant 0 : index
      %c0_23 = arith.constant 0 : index
      %79 = vector.load %arg4[%c0_22, %c0_23] : memref<1x32xf32, #tpu.memory_space<vmem>>, vector<1x32xf32>
      %c0_24 = arith.constant 0 : index
      %c0_25 = arith.constant 0 : index
      %80 = vector.load %arg5[%c0_24, %c0_25] : memref<1x32xf32, #tpu.memory_space<vmem>>, vector<1x32xf32>
      %81 = arith.cmpf one, %78, %78 : vector<1x32xf32>
      %82 = arith.extui %81 : vector<1x32xi1> to vector<1x32xi32>
      %83 = vector.shape_cast %82 : vector<1x32xi32> to vector<1x1x32xi32>
      %cst_26 = arith.constant dense<0> : vector<1xi32>
      %84 = vector.multi_reduction <add>, %83, %cst_26 [1, 2] : vector<1x1x32xi32> to vector<1xi32>
      %85 = vector.shape_cast %84 : vector<1xi32> to vector<1x1x1xi32>
      %86 = vector.extract %85[0, 0, 0] : i32 from vector<1x1x1xi32>
      %c0_i32_27 = arith.constant 0 : i32
      %87 = arith.cmpi eq, %86, %c0_i32_27 : i32
      %cst_28 = arith.constant 0.899999976 : f32
      %88 = vector.broadcast %cst_28 : f32 to vector<1x32xf32>
      %89 = arith.mulf %88, %79 : vector<1x32xf32>
      %cst_29 = arith.constant 1.000000e-01 : f32
      %90 = vector.broadcast %cst_29 : f32 to vector<1x32xf32>
      %91 = arith.mulf %90, %54 : vector<1x32xf32>
      %92 = arith.addf %89, %91 : vector<1x32xf32>
      %93 = arith.select %87, %92, %79 : vector<1x32xf32>
      %cst_30 = arith.constant 0.899999976 : f32
      %94 = vector.broadcast %cst_30 : f32 to vector<1x32xf32>
      %95 = arith.mulf %94, %80 : vector<1x32xf32>
      %cst_31 = arith.constant 1.000000e-01 : f32
      %96 = vector.broadcast %cst_31 : f32 to vector<1x32xf32>
      %97 = arith.mulf %96, %78 : vector<1x32xf32>
      %98 = arith.addf %95, %97 : vector<1x32xf32>
      %99 = arith.select %87, %98, %80 : vector<1x32xf32>
      %100 = arith.subf %93, %99 : vector<1x32xf32>
      %cst_32 = arith.constant 1.000000e-03 : f32
      %cst_33 = arith.constant 0.111111112 : f32
      %101 = vector.broadcast %cst_32 : f32 to vector<1x32xf32>
      %102 = arith.maximumf %101, %100 : vector<1x32xf32>
      %103 = vector.broadcast %cst_33 : f32 to vector<1x32xf32>
      %104 = arith.minimumf %103, %102 : vector<1x32xf32>
      %105 = tpu.reciprocal %104 : vector<1x32xf32> -> vector<1x32xf32>
      %c0_34 = arith.constant 0 : index
      %c0_35 = arith.constant 0 : index
      %106 = vector.load %arg7[%c0_34, %c0_35] : memref<1x32xf32, #tpu.memory_space<vmem>>, vector<1x32xf32>
      tpu.vector_store %arg7[%c0_34, %c0_35], %93 {strides = array<i32>} : memref<1x32xf32, #tpu.memory_space<vmem>>, vector<1x32xf32>,
      %c0_36 = arith.constant 0 : index
      %c0_37 = arith.constant 0 : index
      %107 = vector.load %arg8[%c0_36, %c0_37] : memref<1x32xf32, #tpu.memory_space<vmem>>, vector<1x32xf32>
      tpu.vector_store %arg8[%c0_36, %c0_37], %99 {strides = array<i32>} : memref<1x32xf32, #tpu.memory_space<vmem>>, vector<1x32xf32>,
      %108 = tpu.concatenate %104, %104, %104, %104 in 1 : vector<1x32xf32>, vector<1x32xf32>, vector<1x32xf32>, vector<1x32xf32> -> vector<1x128xf32>
      %c0_38 = arith.constant 0 : index
      %c0_39 = arith.constant 0 : index
      %109 = vector.load %arg12[%c0_38, %c0_39] : memref<1x128xf32, #tpu.memory_space<vmem>>, vector<1x128xf32>
      tpu.vector_store %arg12[%c0_38, %c0_39], %108 {strides = array<i32>} : memref<1x128xf32, #tpu.memory_space<vmem>>, vector<1x128xf32>,
      %110 = tpu.concatenate %105, %105, %105, %105 in 1 : vector<1x32xf32>, vector<1x32xf32>, vector<1x32xf32>, vector<1x32xf32> -> vector<1x128xf32>
      %c0_40 = arith.constant 0 : index
      %c0_41 = arith.constant 0 : index
      %111 = vector.load %arg13[%c0_40, %c0_41] : memref<1x128xf32, #tpu.memory_space<vmem>>, vector<1x128xf32>
      tpu.vector_store %arg13[%c0_40, %c0_41], %110 {strides = array<i32>} : memref<1x128xf32, #tpu.memory_space<vmem>>, vector<1x128xf32>,
      %cst_42 = arith.constant 0.000000e+00 : f32
      %112 = vector.broadcast %cst_42 : f32 to vector<1x128xf32>
      %c0_43 = arith.constant 0 : index
      %c0_44 = arith.constant 0 : index
      %113 = vector.load %arg14[%c0_43, %c0_44] : memref<1x128xf32, #tpu.memory_space<vmem>>, vector<1x128xf32>
      tpu.vector_store %arg14[%c0_43, %c0_44], %112 {strides = array<i32>} : memref<1x128xf32, #tpu.memory_space<vmem>>, vector<1x128xf32>,
    } else {
    }
    %true = arith.constant true
    %20 = arith.xori %3, %true : i1
    %21 = arith.andi %0, %20 : i1
    %22 = arith.extui %21 : i1 to i32
    %c0_i32_6 = arith.constant 0 : i32
    %23 = arith.cmpi ne, %22, %c0_i32_6 : i32
    scf.if %23 {
      %c0_11 = arith.constant 0 : index
      %c0_12 = arith.constant 0 : index
      %36 = vector.load %arg9[%c0_11, %c0_12] : memref<1x128xf32, #tpu.memory_space<vmem>>, vector<1x128xf32>
      %37 = vector.broadcast %36 : vector<1x128xf32> to vector<16x128xf32>
      %38 = arith.subf %7, %37 : vector<16x128xf32>
      %c0_13 = arith.constant 0 : index
      %c0_14 = arith.constant 0 : index
      %39 = vector.load %arg10[%c0_13, %c0_14] : memref<1x128xf32, #tpu.memory_space<vmem>>, vector<1x128xf32>
      %cst = arith.constant dense<0.000000e+00> : vector<128xf32>
      %40 = vector.multi_reduction <add>, %38, %cst [0] : vector<16x128xf32> to vector<128xf32>
      %41 = vector.shape_cast %40 : vector<128xf32> to vector<1x128xf32>
      %42 = arith.addf %39, %41 : vector<1x128xf32>
      %c0_15 = arith.constant 0 : index
      %c0_16 = arith.constant 0 : index
      %43 = vector.load %arg10[%c0_15, %c0_16] : memref<1x128xf32, #tpu.memory_space<vmem>>, vector<1x128xf32>
      tpu.vector_store %arg10[%c0_15, %c0_16], %42 {strides = array<i32>} : memref<1x128xf32, #tpu.memory_space<vmem>>, vector<1x128xf32>,
      %c0_17 = arith.constant 0 : index
      %c0_18 = arith.constant 0 : index
      %44 = vector.load %arg11[%c0_17, %c0_18] : memref<1x128xf32, #tpu.memory_space<vmem>>, vector<1x128xf32>
      %45 = arith.mulf %38, %38 : vector<16x128xf32>
      %cst_19 = arith.constant dense<0.000000e+00> : vector<128xf32>
      %46 = vector.multi_reduction <add>, %45, %cst_19 [0] : vector<16x128xf32> to vector<128xf32>
      %47 = vector.shape_cast %46 : vector<128xf32> to vector<1x128xf32>
      %48 = arith.addf %44, %47 : vector<1x128xf32>
      %c0_20 = arith.constant 0 : index
      %c0_21 = arith.constant 0 : index
      %49 = vector.load %arg11[%c0_20, %c0_21] : memref<1x128xf32, #tpu.memory_space<vmem>>, vector<1x128xf32>
      tpu.vector_store %arg11[%c0_20, %c0_21], %48 {strides = array<i32>} : memref<1x128xf32, #tpu.memory_space<vmem>>, vector<1x128xf32>,
    } else {
    }
    %24 = arith.andi %0, %3 : i1
    %25 = arith.extui %24 : i1 to i32
    %c0_i32_7 = arith.constant 0 : i32
    %26 = arith.cmpi ne, %25, %c0_i32_7 : i32
    scf.if %26 {
      %c0_11 = arith.constant 0 : index
      %c0_12 = arith.constant 0 : index
      %36 = vector.load %arg9[%c0_11, %c0_12] : memref<1x128xf32, #tpu.memory_space<vmem>>, vector<1x128xf32>
      %37 = vector.broadcast %36 : vector<1x128xf32> to vector<16x128xf32>
      %38 = arith.subf %7, %37 : vector<16x128xf32>
      %cst = arith.constant 0.000000e+00 : f32
      %39 = vector.shape_cast %13 : vector<16x1xi1> to vector<16x1xi1>
      %40 = vector.broadcast %39 : vector<16x1xi1> to vector<16x128xi1>
      %41 = vector.broadcast %cst : f32 to vector<16x128xf32>
      %42 = arith.select %40, %38, %41 : vector<16x128xi1>, vector<16x128xf32>
      %c0_13 = arith.constant 0 : index
      %c0_14 = arith.constant 0 : index
      %43 = vector.load %arg10[%c0_13, %c0_14] : memref<1x128xf32, #tpu.memory_space<vmem>>, vector<1x128xf32>
      %cst_15 = arith.constant dense<0.000000e+00> : vector<128xf32>
      %44 = vector.multi_reduction <add>, %42, %cst_15 [0] : vector<16x128xf32> to vector<128xf32>
      %45 = vector.shape_cast %44 : vector<128xf32> to vector<1x128xf32>
      %46 = arith.addf %43, %45 : vector<1x128xf32>
      %c0_16 = arith.constant 0 : index
      %c0_17 = arith.constant 0 : index
      %47 = vector.load %arg10[%c0_16, %c0_17] : memref<1x128xf32, #tpu.memory_space<vmem>>, vector<1x128xf32>
      tpu.vector_store %arg10[%c0_16, %c0_17], %46 {strides = array<i32>} : memref<1x128xf32, #tpu.memory_space<vmem>>, vector<1x128xf32>,
      %c0_18 = arith.constant 0 : index
      %c0_19 = arith.constant 0 : index
      %48 = vector.load %arg11[%c0_18, %c0_19] : memref<1x128xf32, #tpu.memory_space<vmem>>, vector<1x128xf32>
      %49 = arith.mulf %42, %42 : vector<16x128xf32>
      %cst_20 = arith.constant dense<0.000000e+00> : vector<128xf32>
      %50 = vector.multi_reduction <add>, %49, %cst_20 [0] : vector<16x128xf32> to vector<128xf32>
      %51 = vector.shape_cast %50 : vector<128xf32> to vector<1x128xf32>
      %52 = arith.addf %48, %51 : vector<1x128xf32>
      %c0_21 = arith.constant 0 : index
      %c0_22 = arith.constant 0 : index
      %53 = vector.load %arg11[%c0_21, %c0_22] : memref<1x128xf32, #tpu.memory_space<vmem>>, vector<1x128xf32>
      tpu.vector_store %arg11[%c0_21, %c0_22], %52 {strides = array<i32>} : memref<1x128xf32, #tpu.memory_space<vmem>>, vector<1x128xf32>,
    } else {
    }
    %27 = arith.andi %1, %20 : i1
    %28 = arith.extui %27 : i1 to i32
    %c0_i32_8 = arith.constant 0 : i32
    %29 = arith.cmpi ne, %28, %c0_i32_8 : i32
    scf.if %29 {
      %c0_11 = arith.constant 0 : index
      %c0_12 = arith.constant 0 : index
      %36 = vector.load %arg12[%c0_11, %c0_12] : memref<1x128xf32, #tpu.memory_space<vmem>>, vector<1x128xf32>
      %c0_13 = arith.constant 0 : index
      %c0_14 = arith.constant 0 : index
      %37 = vector.load %arg13[%c0_13, %c0_14] : memref<1x128xf32, #tpu.memory_space<vmem>>, vector<1x128xf32>
      %38 = vector.broadcast %36 : vector<1x128xf32> to vector<16x128xf32>
      %39 = arith.cmpf olt, %7, %38 : vector<16x128xf32>
      %40 = arith.mulf %7, %7 : vector<16x128xf32>
      %cst = arith.constant 5.000000e-01 : f32
      %41 = vector.broadcast %cst : f32 to vector<16x128xf32>
      %42 = arith.mulf %41, %40 : vector<16x128xf32>
      %43 = vector.broadcast %37 : vector<1x128xf32> to vector<16x128xf32>
      %44 = arith.mulf %42, %43 : vector<16x128xf32>
      %cst_15 = arith.constant 5.000000e-01 : f32
      %45 = vector.broadcast %cst_15 : f32 to vector<1x128xf32>
      %46 = arith.mulf %45, %36 : vector<1x128xf32>
      %47 = vector.broadcast %46 : vector<1x128xf32> to vector<16x128xf32>
      %48 = arith.subf %7, %47 : vector<16x128xf32>
      %49 = arith.select %39, %44, %48 : vector<16x128xi1>, vector<16x128xf32>
      %c0_16 = arith.constant 0 : index
      %c0_17 = arith.constant 0 : index
      %50 = vector.load %arg14[%c0_16, %c0_17] : memref<1x128xf32, #tpu.memory_space<vmem>>, vector<1x128xf32>
      %cst_18 = arith.constant dense<0.000000e+00> : vector<128xf32>
      %51 = vector.multi_reduction <add>, %49, %cst_18 [0] : vector<16x128xf32> to vector<128xf32>
      %52 = vector.shape_cast %51 : vector<128xf32> to vector<1x128xf32>
      %53 = arith.addf %50, %52 : vector<1x128xf32>
      %c0_19 = arith.constant 0 : index
      %c0_20 = arith.constant 0 : index
      %54 = vector.load %arg14[%c0_19, %c0_20] : memref<1x128xf32, #tpu.memory_space<vmem>>, vector<1x128xf32>
      tpu.vector_store %arg14[%c0_19, %c0_20], %53 {strides = array<i32>} : memref<1x128xf32, #tpu.memory_space<vmem>>, vector<1x128xf32>,
    } else {
    }
    %30 = arith.andi %1, %3 : i1
    %31 = arith.extui %30 : i1 to i32
    %c0_i32_9 = arith.constant 0 : i32
    %32 = arith.cmpi ne, %31, %c0_i32_9 : i32
    scf.if %32 {
      %c0_11 = arith.constant 0 : index
      %c0_12 = arith.constant 0 : index
      %36 = vector.load %arg12[%c0_11, %c0_12] : memref<1x128xf32, #tpu.memory_space<vmem>>, vector<1x128xf32>
      %c0_13 = arith.constant 0 : index
      %c0_14 = arith.constant 0 : index
      %37 = vector.load %arg13[%c0_13, %c0_14] : memref<1x128xf32, #tpu.memory_space<vmem>>, vector<1x128xf32>
      %38 = vector.broadcast %36 : vector<1x128xf32> to vector<16x128xf32>
      %39 = arith.cmpf olt, %7, %38 : vector<16x128xf32>
      %40 = arith.mulf %7, %7 : vector<16x128xf32>
      %cst = arith.constant 5.000000e-01 : f32
      %41 = vector.broadcast %cst : f32 to vector<16x128xf32>
      %42 = arith.mulf %41, %40 : vector<16x128xf32>
      %43 = vector.broadcast %37 : vector<1x128xf32> to vector<16x128xf32>
      %44 = arith.mulf %42, %43 : vector<16x128xf32>
      %cst_15 = arith.constant 5.000000e-01 : f32
      %45 = vector.broadcast %cst_15 : f32 to vector<1x128xf32>
      %46 = arith.mulf %45, %36 : vector<1x128xf32>
      %47 = vector.broadcast %46 : vector<1x128xf32> to vector<16x128xf32>
      %48 = arith.subf %7, %47 : vector<16x128xf32>
      %49 = arith.select %39, %44, %48 : vector<16x128xi1>, vector<16x128xf32>
      %cst_16 = arith.constant 0.000000e+00 : f32
      %50 = vector.shape_cast %13 : vector<16x1xi1> to vector<16x1xi1>
      %51 = vector.broadcast %50 : vector<16x1xi1> to vector<16x128xi1>
      %52 = vector.broadcast %cst_16 : f32 to vector<16x128xf32>
      %53 = arith.select %51, %49, %52 : vector<16x128xi1>, vector<16x128xf32>
      %c0_17 = arith.constant 0 : index
      %c0_18 = arith.constant 0 : index
      %54 = vector.load %arg14[%c0_17, %c0_18] : memref<1x128xf32, #tpu.memory_space<vmem>>, vector<1x128xf32>
      %cst_19 = arith.constant dense<0.000000e+00> : vector<128xf32>
      %55 = vector.multi_reduction <add>, %53, %cst_19 [0] : vector<16x128xf32> to vector<128xf32>
      %56 = vector.shape_cast %55 : vector<128xf32> to vector<1x128xf32>
      %57 = arith.addf %54, %56 : vector<1x128xf32>
      %c0_20 = arith.constant 0 : index
      %c0_21 = arith.constant 0 : index
      %58 = vector.load %arg14[%c0_20, %c0_21] : memref<1x128xf32, #tpu.memory_space<vmem>>, vector<1x128xf32>
      tpu.vector_store %arg14[%c0_20, %c0_21], %57 {strides = array<i32>} : memref<1x128xf32, #tpu.memory_space<vmem>>, vector<1x128xf32>,
    } else {
    }
    %33 = arith.andi %1, %3 : i1
    %34 = arith.extui %33 : i1 to i32
    %c0_i32_10 = arith.constant 0 : i32
    %35 = arith.cmpi ne, %34, %c0_i32_10 : i32
    scf.if %35 {
      %c0_11 = arith.constant 0 : index
      %c0_12 = arith.constant 0 : index
      %36 = vector.load %arg14[%c0_11, %c0_12] : memref<1x128xf32, #tpu.memory_space<vmem>>, vector<1x128xf32>
      %37 = vector.shape_cast %36 : vector<1x128xf32> to vector<1x1x128xf32>
      %cst = arith.constant dense<0.000000e+00> : vector<1xf32>
      %38 = vector.multi_reduction <add>, %37, %cst [1, 2] : vector<1x1x128xf32> to vector<1xf32>
      %39 = vector.shape_cast %38 : vector<1xf32> to vector<1x1x1xf32>
      %40 = vector.extract %39[0, 0, 0] : f32 from vector<1x1x1xf32>
      %cst_13 = arith.constant 1.562500e-04 : f32
      %41 = arith.mulf %40, %cst_13 : f32
      %c0_14 = arith.constant 0 : index
      %c0_15 = arith.constant 0 : index
      %42 = memref.load %arg6[%c0_14, %c0_15] : memref<1x1xf32, #tpu.memory_space<smem>>
      memref.store %41, %arg6[%c0_14, %c0_15] : memref<1x1xf32, #tpu.memory_space<smem>>
    } else {
    }
    return
  }
  func.func @transform_0(%arg0: i32, %arg1: i32) -> (i32, i32) {
    %c0_i32 = arith.constant 0 : i32
    %c0_i32_0 = arith.constant 0 : i32
    return %arg1, %c0_i32 : i32, i32
  }
  func.func @transform_1(%arg0: i32, %arg1: i32) -> (i32, i32) {
    %c0_i32 = arith.constant 0 : i32
    %c0_i32_0 = arith.constant 0 : i32
    return %arg1, %c0_i32 : i32, i32
  }
  func.func @transform_2(%arg0: i32, %arg1: i32) -> (i32, i32) {
    %c0_i32 = arith.constant 0 : i32
    %c0_i32_0 = arith.constant 0 : i32
    %c0_i32_1 = arith.constant 0 : i32
    return %c0_i32, %c0_i32_0 : i32, i32
  }
  func.func @transform_3(%arg0: i32, %arg1: i32) -> (i32, i32) {
    %c0_i32 = arith.constant 0 : i32
    %c0_i32_0 = arith.constant 0 : i32
    %c0_i32_1 = arith.constant 0 : i32
    return %c0_i32, %c0_i32_0 : i32, i32
  }
  func.func @transform_4(%arg0: i32, %arg1: i32) -> (i32, i32) {
    %c0_i32 = arith.constant 0 : i32
    %c0_i32_0 = arith.constant 0 : i32
    %c0_i32_1 = arith.constant 0 : i32
    return %c0_i32, %c0_i32_0 : i32, i32
  }
  func.func @transform_5(%arg0: i32, %arg1: i32) -> (i32, i32) {
    %c0_i32 = arith.constant 0 : i32
    %c0_i32_0 = arith.constant 0 : i32
    %c0_i32_1 = arith.constant 0 : i32
    return %c0_i32, %c0_i32_0 : i32, i32
  }
  func.func @transform_6(%arg0: i32, %arg1: i32) -> (i32, i32) {
    %c0_i32 = arith.constant 0 : i32
    %c0_i32_0 = arith.constant 0 : i32
    %c0_i32_1 = arith.constant 0 : i32
    return %c0_i32, %c0_i32_0 : i32, i32
  }
}

</mosaic_0001>

<llo_original>
// kernel: adjust_smooth_l1_loss.1
$region0: #{adjust_smooth_l1_loss.1}
  #allocation0 [shape = 'u32[]', space=smem, size = 0x4, offset = 0x4, fixed_abs, tag = 'smem constant byte address 0x4 - core index']
  #allocation1 [shape = 'u32[72,128]{1,0:T(1,128)}', space=vmem, size = 0x9000, scoped, tag = 'internal scratch']
  #allocation2 [shape = 'f32[1,128]{1,0:T(1,128)}', space=vmem, size = 0x200, scoped, tag = 'scratch operand']
  #allocation3 [shape = 'f32[1,128]{1,0:T(1,128)}', space=vmem, size = 0x200, scoped, tag = 'scratch operand']
  #allocation4 [shape = 'f32[1,128]{1,0:T(1,128)}', space=vmem, size = 0x200, scoped, tag = 'scratch operand']
  #allocation5 [shape = 'f32[1,128]{1,0:T(1,128)}', space=vmem, size = 0x200, scoped, tag = 'scratch operand']
  #allocation6 [shape = 'f32[1,128]{1,0:T(1,128)}', space=vmem, size = 0x200, scoped, tag = 'scratch operand']
  #allocation7 [shape = 'f32[1,128]{1,0:T(1,128)}', space=vmem, size = 0x200, scoped, tag = 'scratch operand']
  %s0 = inlined_call_operand.vmem [shape: f32[50,128], index: 0, kind: input, shape index: {}]
  %s1 = inlined_call_operand.vmem [shape: f32[50,128], index: 1, kind: input, shape index: {}]
  %s2 = inlined_call_operand.vmem [shape: f32[1,32], index: 2, kind: input, shape index: {}, may-alias: {2,5}]
  %s3 = inlined_call_operand.vmem [shape: f32[1,32], index: 3, kind: input, shape index: {}, may-alias: {3,6}]
  %s4 = inlined_call_operand.hbm [shape: f32[1,1], index: 4, kind: output, shape index: {0}]
  %s5 = inlined_call_operand.vmem [shape: f32[1,32], index: 5, kind: output, shape index: {1}, may-alias: {2,5}]
  %s6 = inlined_call_operand.vmem [shape: f32[1,32], index: 6, kind: output, shape index: {2}, may-alias: {3,6}]
  %7 = xla_tuple %s4, %s5, %s6
  %s8 = sld [smem:[#allocation0]]
  $region89: #{adjust_smooth_l1_loss.1} parent=0
    _
  %s10 = ssub.s32 1, %s8
  %s11 = scalar_select 0, %s10, %s8
  $region1: #{adjust_smooth_l1_loss.1} parent=0
    #allocation8 [shape = 'u8[512]{0}', space=smem, size = 0x200, scoped, tag = 'output window, operand 0, single buffered']
    #allocation9 [shape = 's32[2]{0}', space=sflag, size = 0x8, scoped, tag = 'scoped memory for adjust_smooth_l1_loss.1']
    %12 = vsyncpa [#allocation9], 0
    loop: start=0, step=1, limit=10
    $region2: #{adjust_smooth_l1_loss.1} parent=1 // loop_pre_header
      _
    $region3: #{adjust_smooth_l1_loss.1} parent=1 // loop_header
      %s14 = sphi 0, %s18
      %p15 = scmp.ge.s32.totalorder %s14, 10
      %s21 = sphi 0, %s33
      %s22 = sphi 0, %s29
      %s23 = sphi 0, %s21
      %s24 = sphi 0, %s22
      %s25 = sphi 0, %s23
      %s26 = sphi 0, %s24
      %s36 = sphi 0, %s38
      %s39 = sphi 0, %s36
      %s40 = sphi 0, %s39
      %s56 = sphi 0, %s40
      %s62 = sphi 0, %s64
      %s65 = sphi 0, %s62
      %s66 = sphi 0, %s65
      %s82 = sphi 0, %s66
      %s86 = sphi 0, %s86
      %s88 = sphi 0, %s86
      %s89 = sphi 0, %s88
      %s103 = sphi 0, %s89
      %s107 = sphi 0, %s107
      %s109 = sphi 0, %s107
      %s110 = sphi 0, %s109
      %s124 = sphi 0, %s110
      %s128 = sphi 0, %s128
      %s130 = sphi 0, %s128
      %s131 = sphi 0, %s130
      %s145 = sphi 0, %s131
      %s149 = sphi 0, %s149
      %s151 = sphi 0, %s149
      %s152 = sphi 0, %s151
      %s166 = sphi 0, %s152
      %s170 = sphi 0, %s170
      %s172 = sphi 0, %s170
      %s173 = sphi 0, %s172
      %s187 = sphi 0, %s173
    $region4: #{adjust_smooth_l1_loss.1} parent=1 // loop_header_branch
      %17 = sbr.rel (%p15) target = $region8
    $region5: #{adjust_smooth_l1_loss.1} parent=1 // loop_body
      %s19 = ssub.s32 %s14, 1
      %s20 = ssub.s32 %s14, 2
      %s27 = sadd.s32 1, %s22
      %p28 = scmp.ge.s32.totalorder %s27, 4
      %s29 = scalar_select %p28, 0, %s27
      %s30 = sadd.s32 1, %s21
      %s31 = scalar_select %p28, %s30, %s21
      %p32 = scmp.ge.s32.totalorder %s31, 2
      %s33 = scalar_select %p32, 0, %s31
      %s34 = ssub.s32 %s22, %s29
      %p35 = scmp.eq.s32.totalorder %s34, 0
      %s37 = sadd.s32 %s36, 1
      %s38 = scalar_select %p35, %s36, %s37
      %p41 = pneg %p35
      %p42 = scmp.eq.s32.totalorder %s14, 7
      %p43 = por %p41, %p42
      %p44 = scmp.ne.s32.totalorder %s36, %s39
      %p45 = scmp.eq.s32.totalorder %s14, 0
      %p46 = por %p44, %p45
      %p47 = scmp.ne.s32.totalorder %s36, %s39
      %p48 = scmp.eq.s32.totalorder %s19, 7
      %p49 = por %p47, %p48
      %p50 = scmp.ne.s32.totalorder %s39, %s40
      %p51 = scmp.eq.s32.totalorder %s19, 0
      %p52 = por %p50, %p51
      %p53 = scmp.ne.s32.totalorder %s39, %s40
      %p54 = scmp.eq.s32.totalorder %s20, 7
      %p55 = por %p53, %p54
      %p57 = scmp.ne.s32.totalorder %s40, %s56
      %p58 = scmp.eq.s32.totalorder %s20, 0
      %p59 = por %p57, %p58
      %s60 = ssub.s32 %s22, %s29
      %p61 = scmp.eq.s32.totalorder %s60, 0
      %s63 = sadd.s32 %s62, 1
      %s64 = scalar_select %p61, %s62, %s63
      %p67 = pneg %p61
      %p68 = scmp.eq.s32.totalorder %s14, 7
      %p69 = por %p67, %p68
      %p70 = scmp.ne.s32.totalorder %s62, %s65
      %p71 = scmp.eq.s32.totalorder %s14, 0
      %p72 = por %p70, %p71
      %p73 = scmp.ne.s32.totalorder %s62, %s65
      %p74 = scmp.eq.s32.totalorder %s19, 7
      %p75 = por %p73, %p74
      %p76 = scmp.ne.s32.totalorder %s65, %s66
      %p77 = scmp.eq.s32.totalorder %s19, 0
      %p78 = por %p76, %p77
      %p79 = scmp.ne.s32.totalorder %s65, %s66
      %p80 = scmp.eq.s32.totalorder %s20, 7
      %p81 = por %p79, %p80
      %p83 = scmp.ne.s32.totalorder %s66, %s82
      %p84 = scmp.eq.s32.totalorder %s20, 0
      %p85 = por %p83, %p84
      %s87 = sadd.s32 %s86, 1
      %p90 = scmp.eq.s32.totalorder %s14, 7
      %p91 = scmp.ne.s32.totalorder %s86, %s88
      %p92 = scmp.eq.s32.totalorder %s14, 0
      %p93 = por %p91, %p92
      %p94 = scmp.ne.s32.totalorder %s86, %s88
      %p95 = scmp.eq.s32.totalorder %s19, 7
      %p96 = por %p94, %p95
      %p97 = scmp.ne.s32.totalorder %s88, %s89
      %p98 = scmp.eq.s32.totalorder %s19, 0
      %p99 = por %p97, %p98
      %p100 = scmp.ne.s32.totalorder %s88, %s89
      %p101 = scmp.eq.s32.totalorder %s20, 7
      %p102 = por %p100, %p101
      %p104 = scmp.ne.s32.totalorder %s89, %s103
      %p105 = scmp.eq.s32.totalorder %s20, 0
      %p106 = por %p104, %p105
      %s108 = sadd.s32 %s107, 1
      %p111 = scmp.eq.s32.totalorder %s14, 7
      %p112 = scmp.ne.s32.totalorder %s107, %s109
      %p113 = scmp.eq.s32.totalorder %s14, 0
      %p114 = por %p112, %p113
      %p115 = scmp.ne.s32.totalorder %s107, %s109
      %p116 = scmp.eq.s32.totalorder %s19, 7
      %p117 = por %p115, %p116
      %p118 = scmp.ne.s32.totalorder %s109, %s110
      %p119 = scmp.eq.s32.totalorder %s19, 0
      %p120 = por %p118, %p119
      %p121 = scmp.ne.s32.totalorder %s109, %s110
      %p122 = scmp.eq.s32.totalorder %s20, 7
      %p123 = por %p121, %p122
      %p125 = scmp.ne.s32.totalorder %s110, %s124
      %p126 = scmp.eq.s32.totalorder %s20, 0
      %p127 = por %p125, %p126
      %s129 = sadd.s32 %s128, 1
      %p132 = scmp.eq.s32.totalorder %s14, 7
      %p133 = scmp.ne.s32.totalorder %s128, %s130
      %p134 = scmp.eq.s32.totalorder %s14, 0
      %p135 = por %p133, %p134
      %p136 = scmp.ne.s32.totalorder %s128, %s130
      %p137 = scmp.eq.s32.totalorder %s19, 7
      %p138 = por %p136, %p137
      %p139 = scmp.ne.s32.totalorder %s130, %s131
      %p140 = scmp.eq.s32.totalorder %s19, 0
      %p141 = por %p139, %p140
      %p142 = scmp.ne.s32.totalorder %s130, %s131
      %p143 = scmp.eq.s32.totalorder %s20, 7
      %p144 = por %p142, %p143
      %p146 = scmp.ne.s32.totalorder %s131, %s145
      %p147 = scmp.eq.s32.totalorder %s20, 0
      %p148 = por %p146, %p147
      %s150 = sadd.s32 %s149, 1
      %p153 = scmp.eq.s32.totalorder %s14, 7
      %p154 = scmp.ne.s32.totalorder %s149, %s151
      %p155 = scmp.eq.s32.totalorder %s14, 0
      %p156 = por %p154, %p155
      %p157 = scmp.ne.s32.totalorder %s149, %s151
      %p158 = scmp.eq.s32.totalorder %s19, 7
      %p159 = por %p157, %p158
      %p160 = scmp.ne.s32.totalorder %s151, %s152
      %p161 = scmp.eq.s32.totalorder %s19, 0
      %p162 = por %p160, %p161
      %p163 = scmp.ne.s32.totalorder %s151, %s152
      %p164 = scmp.eq.s32.totalorder %s20, 7
      %p165 = por %p163, %p164
      %p167 = scmp.ne.s32.totalorder %s152, %s166
      %p168 = scmp.eq.s32.totalorder %s20, 0
      %p169 = por %p167, %p168
      %s171 = sadd.s32 %s170, 1
      %p174 = scmp.eq.s32.totalorder %s14, 7
      %p175 = scmp.ne.s32.totalorder %s170, %s172
      %p176 = scmp.eq.s32.totalorder %s14, 0
      %p177 = por %p175, %p176
      %p178 = scmp.ne.s32.totalorder %s170, %s172
      %p179 = scmp.eq.s32.totalorder %s19, 7
      %p180 = por %p178, %p179
      %p181 = scmp.ne.s32.totalorder %s172, %s173
      %p182 = scmp.eq.s32.totalorder %s19, 0
      %p183 = por %p181, %p182
      %p184 = scmp.ne.s32.totalorder %s172, %s173
      %p185 = scmp.eq.s32.totalorder %s20, 7
      %p186 = por %p184, %p185
      %p188 = scmp.ne.s32.totalorder %s173, %s187
      %p189 = scmp.eq.s32.totalorder %s20, 0
      %p190 = por %p188, %p189
      %p191 = scmp.le.s32.totalorder 1, %s14
      %p192 = scmp.lt.s32.totalorder %s14, 9
      %p193 = pnand %p191, %p192
      %p194 = pneg %p193
      // Predicated region
      $region9: #{adjust_smooth_l1_loss.1} parent=5 // pred_check
        _
      $region10: #{adjust_smooth_l1_loss.1} parent=5 // pred_check_branch
        %196 = sbr.rel (%p193) target = $region12
      $region11: #{adjust_smooth_l1_loss.1} parent=5 // pred_region
        %s197 = ssub.s32 %s14, 1
        // Predicated region
        $region13: #{adjust_smooth_l1_loss.1} parent=11 // pred_check
          %p198 = pneg %p99
        $region14: #{adjust_smooth_l1_loss.1} parent=11 // pred_check_branch
          %200 = sbr.rel (%p198) target = $region16
        $region15: #{adjust_smooth_l1_loss.1} parent=11 // pred_region
          _
        $region16: #{adjust_smooth_l1_loss.1} parent=11 // pred_fallthru
          _
        // Predicated region
        $region17: #{adjust_smooth_l1_loss.1} parent=11 // pred_check
          %p201 = pneg %p120
        $region18: #{adjust_smooth_l1_loss.1} parent=11 // pred_check_branch
          %203 = sbr.rel (%p201) target = $region20
        $region19: #{adjust_smooth_l1_loss.1} parent=11 // pred_region
          _
        $region20: #{adjust_smooth_l1_loss.1} parent=11 // pred_fallthru
          _
      $region12: #{adjust_smooth_l1_loss.1} parent=5 // pred_fallthru
        _
      %p204 = scmp.lt.s32.totalorder %s14, 8
      // Predicated region
      $region21: #{adjust_smooth_l1_loss.1} parent=5 // pred_check
        %p205 = pneg %p204
      $region22: #{adjust_smooth_l1_loss.1} parent=5 // pred_check_branch
        %207 = sbr.rel (%p205) target = $region24
      $region23: #{adjust_smooth_l1_loss.1} parent=5 // pred_region
        // Predicated region
        $region25: #{adjust_smooth_l1_loss.1} parent=23 // pred_check
          %p208 = pneg %p46
        $region26: #{adjust_smooth_l1_loss.1} parent=23 // pred_check_branch
          %210 = sbr.rel (%p208) target = $region28
        $region27: #{adjust_smooth_l1_loss.1} parent=23 // pred_region
          %s211 = smul.u32 2, %s22
          %s212 = ssub.s32 7, %s211
          %p213 = scmp.lt.s32.totalorder %s212, 2
          %s214 = scalar_select %p213, %s212, 2
          %s215 = smul.u32 8, %s214
          %p216 = scmp.lt.s32.totalorder %s211, 6
          %s217 = scalar_select %p216, %s211, 6
          %s218 = smul.addr %s217, 8
          %s219 = scalar_lea.vmem %s0, %s218
          %s220 = smul.u32 2, %s22
          %s221 = ssub.s32 7, %s220
          %p222 = scmp.lt.s32.totalorder %s221, 2
          %s223 = scalar_select %p222, %s221, 2
          %s224 = smul.u32 8, %s223
        $region28: #{adjust_smooth_l1_loss.1} parent=23 // pred_fallthru
          _
        // Predicated region
        $region29: #{adjust_smooth_l1_loss.1} parent=23 // pred_check
          %p225 = pneg %p72
        $region30: #{adjust_smooth_l1_loss.1} parent=23 // pred_check_branch
          %227 = sbr.rel (%p225) target = $region32
        $region31: #{adjust_smooth_l1_loss.1} parent=23 // pred_region
          %s228 = smul.u32 2, %s22
          %s229 = ssub.s32 7, %s228
          %p230 = scmp.lt.s32.totalorder %s229, 2
          %s231 = scalar_select %p230, %s229, 2
          %s232 = smul.u32 8, %s231
          %p233 = scmp.lt.s32.totalorder %s228, 6
          %s234 = scalar_select %p233, %s228, 6
          %s235 = smul.addr %s234, 8
          %s236 = scalar_lea.vmem %s1, %s235
          %s237 = smul.u32 2, %s22
          %s238 = ssub.s32 7, %s237
          %p239 = scmp.lt.s32.totalorder %s238, 2
          %s240 = scalar_select %p239, %s238, 2
          %s241 = smul.u32 8, %s240
        $region32: #{adjust_smooth_l1_loss.1} parent=23 // pred_fallthru
          _
      $region24: #{adjust_smooth_l1_loss.1} parent=5 // pred_fallthru
        _
      %p242 = scmp.le.s32.totalorder 1, %s14
      %p243 = scmp.lt.s32.totalorder %s14, 9
      %p244 = pnand %p242, %p243
      %p245 = pneg %p244
      // Predicated region
      $region33: #{adjust_smooth_l1_loss.1} parent=5 // pred_check
        _
      $region34: #{adjust_smooth_l1_loss.1} parent=5 // pred_check_branch
        %247 = sbr.rel (%p244) target = $region36
      $region35: #{adjust_smooth_l1_loss.1} parent=5 // pred_region
        %s248 = ssub.s32 %s14, 1
        %s249 = smul.u32 2, %s24
        %s250 = ssub.s32 7, %s249
        %p251 = scmp.lt.s32.totalorder %s250, 2
        %s252 = scalar_select %p251, %s250, 2
        %s253 = smul.u32 8, %s252
        %p254 = scmp.lt.s32.totalorder %s249, 6
        %s255 = scalar_select %p254, %s249, 6
        %s256 = smul.addr %s255, 8
        %s257 = scalar_lea.vmem %s0, %s256
        %p258 = pneg %p52
        %p259 = pneg %p49
        %s260 = smul.u32 2, %s24
        %s261 = ssub.s32 7, %s260
        %p262 = scmp.lt.s32.totalorder %s261, 2
        %s263 = scalar_select %p262, %s261, 2
        %s264 = smul.u32 8, %s263
        %p265 = scmp.lt.s32.totalorder %s260, 6
        %s266 = scalar_select %p265, %s260, 6
        %s267 = smul.addr %s266, 8
        %s268 = scalar_lea.vmem %s1, %s267
        %p269 = pneg %p78
        %p270 = pneg %p75
        %p271 = pneg %p99
        %p272 = pneg %p96
        %p273 = pneg %p120
        %p274 = pneg %p117
        %p275 = pneg %p141
        %p276 = pneg %p138
        %p277 = pneg %p162
        %p278 = pneg %p159
        %p279 = pneg %p183
        %p280 = pneg %p180
        %s281 = smul.u32 2, %s24
        %s282 = ssub.s32 7, %s281
        %p283 = scmp.lt.s32.totalorder %s282, 2
        %s284 = scalar_select %p283, %s282, 2
        %s285 = smul.u32 8, %s284
        %p286 = scmp.lt.s32.totalorder %s281, 6
        %s287 = scalar_select %p286, %s281, 6
        %s288 = smul.addr %s287, 8
        %s289 = scalar_lea.vmem %s0, %s288
        %s290 = smul.u32 2, %s24
        %s291 = ssub.s32 7, %s290
        %p292 = scmp.lt.s32.totalorder %s291, 2
        %s293 = scalar_select %p292, %s291, 2
        %s294 = smul.u32 8, %s293
        %s295 = smul.u32 2, %s24
        %s296 = ssub.s32 7, %s295
        %p297 = scmp.lt.s32.totalorder %s296, 2
        %s298 = scalar_select %p297, %s296, 2
        %s299 = smul.u32 8, %s298
        %p300 = scmp.lt.s32.totalorder %s295, 6
        %s301 = scalar_select %p300, %s295, 6
        %s302 = smul.addr %s301, 8
        %s303 = scalar_lea.vmem %s1, %s302
        %s304 = smul.u32 2, %s24
        %s305 = ssub.s32 7, %s304
        %p306 = scmp.lt.s32.totalorder %s305, 2
        %s307 = scalar_select %p306, %s305, 2
        %s308 = smul.u32 8, %s307
        %p309 = scmp.eq.s32.totalorder %s23, 0
        %p310 = scmp.eq.s32.totalorder %s23, 1
        %p311 = scmp.eq.s32.totalorder %s24, 0
        %p312 = scmp.eq.s32.totalorder %s24, 3
        %v313 = vld [vmem:[%s289] sm:$0xff]
        %v314 = vld [vmem:[%s289 + $0x8] sm:$0xff]
        %v315 = vld [vmem:[%s303] sm:$0xff]
        %v316 = vld [vmem:[%s303 + $0x8] sm:$0xff]
        %v317 = vsub.f32 %v313, %v315
        %v318 = vsub.f32 %v314, %v316
        %v319 = vand.u32 2147483647, %v317
        %v320 = vand.u32 2147483647, %v318
        %s321 = smul.u32 %s24, 16
        %v322 = vlaneseq
        %v323 = vshrl.u32 %v322, 7
        %v324 = vadd.s32 %v323, 8
        %v325 = vstv %s321
        %v326 = vadd.s32 %v325, %v323
        %v327 = vadd.s32 %v325, %v324
        %vm328 = vcmp.lt.s32.totalorder %v326, 50
        %vm329 = vcmp.lt.s32.totalorder %v327, 50
        %p330 = pnand %p309, %p311
        %p331 = pneg %p330
        // Predicated region
        $region37: #{adjust_smooth_l1_loss.1} parent=35 // pred_check
          _
        $region38: #{adjust_smooth_l1_loss.1} parent=35 // pred_check_branch
          %333 = sbr.rel (%p330) target = $region40
        $region39: #{adjust_smooth_l1_loss.1} parent=35 // pred_region
          %v334 = vadd.f32 %v319, %v320
          %v335 = vrot.slane %v334, 4
          %v336 = vadd.f32 %v334, %v335
          %v337 = vrot.slane %v336, 2
          %v338 = vadd.f32 %v336, %v337
          %v339 = vrot.slane %v338, 1
          %v340 = vadd.f32 %v338, %v339
          %v341 = vmul.f32 %v340, 0.0625
          %342 = vst [vmem:[#allocation2] sm:$0x1] %v341
          %343 = vst [vmem:[#allocation3] sm:$0x1] 0.0
          %344 = vst [vmem:[#allocation4] sm:$0x1] 0.0
        $region40: #{adjust_smooth_l1_loss.1} parent=35 // pred_fallthru
          _
        %p345 = pnand %p310, %p311
        %p346 = pneg %p345
        // Predicated region
        $region41: #{adjust_smooth_l1_loss.1} parent=35 // pred_check
          _
        $region42: #{adjust_smooth_l1_loss.1} parent=35 // pred_check_branch
          %348 = sbr.rel (%p345) target = $region44
        $region43: #{adjust_smooth_l1_loss.1} parent=35 // pred_region
          %v349 = vld [vmem:[#allocation2] sm:$0x1]
          %v350 = vld [vmem:[#allocation3] sm:$0x1]
          %v351 = vld [vmem:[#allocation4] sm:$0x1]
          %v352 = vmul.f32 %v350, 0.02
          %v353 = vadd.f32 %v349, %v352
          %v354 = vmul.f32 %v350, %v350
          %v355 = vmul.f32 %v354, 0.02
          %v356 = vsub.f32 %v351, %v355
          %358 = vrot.lane.b32.xlu0 %v353, 96
          %v359 = vpop.permute.xlu0 %358
          %v361 = vadd.f32 %v353, %v359
          %362 = vrot.lane.b32.xlu0 %v353, 64
          %v363 = vpop.permute.xlu0 %362
          %v365 = vadd.f32 %v361, %v363
          %366 = vrot.lane.b32.xlu0 %v353, 32
          %v367 = vpop.permute.xlu0 %366
          %v369 = vadd.f32 %v365, %v367
          %v370 = vmul.f32 %v369, 0.25
          %372 = vrot.lane.b32.xlu0 %v356, 96
          %v373 = vpop.permute.xlu0 %372
          %v375 = vadd.f32 %v356, %v373
          %376 = vrot.lane.b32.xlu0 %v356, 64
          %v377 = vpop.permute.xlu0 %376
          %v379 = vadd.f32 %v375, %v377
          %380 = vrot.lane.b32.xlu0 %v356, 32
          %v381 = vpop.permute.xlu0 %380
          %v383 = vadd.f32 %v379, %v381
          %v384 = vmul.f32 %v353, %v353
          %386 = vrot.lane.b32.xlu0 %v384, 96
          %v387 = vpop.permute.xlu0 %386
          %v389 = vadd.f32 %v384, %v387
          %390 = vrot.lane.b32.xlu0 %v384, 64
          %v391 = vpop.permute.xlu0 %390
          %v393 = vadd.f32 %v389, %v391
          %394 = vrot.lane.b32.xlu0 %v384, 32
          %v395 = vpop.permute.xlu0 %394
          %v397 = vadd.f32 %v393, %v395
          %v398 = vmul.f32 %v370, 4.0
          %v399 = vmul.f32 %v398, %v370
          %v400 = vsub.f32 %v397, %v399
          %v401 = vmul.f32 %v400, 50.0
          %v402 = vadd.f32 %v383, %v401
          %v403 = vmul.f32 %v402, 0.0050251256
          %v404 = vld [vmem:[%s2] sm:$0x1]
          %v405 = vld [vmem:[%s3] sm:$0x1]
          %vm406 = vcmp.ne.f32.partialorder %v403, %v403
          %v407 = vsel %vm406, 1, 0
          %vm408 = vcmask 253952
          %v409 = vsel %vm408, %v407, 0
          %v410 = vand.u32 %v409, 65535
          %v411 = vshrl.u32 %v409, 16
          %v412 = vcvt.s32.f32 %v410
          %v413 = vcvt.s32.f32 %v411
          %414 = vadd.xlane.f32.xlu0 %v412
          %v415 = vpop.xlane.xlu0 %414
          %416 = vadd.xlane.f32.xlu0 %v413
          %v417 = vpop.xlane.xlu0 %416
          %v418 = vcvt.f32.s32 %v415
          %v419 = vcvt.f32.s32 %v417
          %v420 = vshll.u32 %v419, 16
          %v421 = vadd.s32 %v420, %v418
          %v422 = vrot.slane %v421, 4
          %v423 = vadd.s32 %v421, %v422
          %v424 = vrot.slane %v423, 2
          %v425 = vadd.s32 %v423, %v424
          %v426 = vrot.slane %v425, 1
          %v427 = vadd.s32 %v425, %v426
          %s428 = vtos %v427
          %p429 = scmp.eq.s32.totalorder %s428, 0
          %v430 = vmul.f32 %v404, 0.9
          %v431 = vmul.f32 %v370, 0.1
          %v432 = vadd.f32 %v430, %v431
          %s433 = scalar_select %p429, 1, 0
          %v434 = vstv %s433
          %vm435 = vcmp.eq.s32.totalorder %v434, 1
          %v436 = vsel %vm435, %v432, %v404
          %v437 = vmul.f32 %v405, 0.9
          %v438 = vmul.f32 %v403, 0.1
          %v439 = vadd.f32 %v437, %v438
          %v440 = vsel %vm435, %v439, %v405
          %v441 = vsub.f32 %v436, %v440
          %v442 = vmax.f32 %v441, 0.001
          %v443 = vmin.f32 %v442, 0.11111111
          %v444 = vrcp.pop %v443
          %v445 = vmul.f32 %v443, %v444
          %v446 = vsub.f32 1.0, %v445
          %v447 = vmul.f32 %v444, %v446
          %v448 = vadd.f32 %v444, %v447
          %vm449 = vweird.f32 %v443
          %vm450 = vweird.f32 %v444
          %vm451 = vmor %vm449, %vm450
          %v452 = vsel %vm451, %v444, %v448
          %v453 = vand.u32 2147483647, %v443
          %vm454 = vcmp.eq.f32.partialorder %v453, 8.507059e+37
          %v455 = vand.u32 %v443, 2147483648
          %v456 = vor.u32 1.1754944e-38, %v455
          %v457 = vsel %vm454, %v456, %v452
          %458 = vst.msk [vmem:[%s5] sm:$0x1] %vm408, %v436
          %459 = vst.msk [vmem:[%s6] sm:$0x1] %vm408, %v440
          %v461 = vperm.slane %v443, 0
          %462 = vrot.lane.b32.xlu0 %v461, 32
          %v463 = vpop.permute.xlu0 %462
          %465 = vrot.lane.b32.xlu0 %v461, 64
          %v466 = vpop.permute.xlu0 %465
          %468 = vrot.lane.b32.xlu0 %v461, 96
          %v469 = vpop.permute.xlu0 %468
          %vm471 = vcmask 261120
          %v472 = vsel %vm471, %v443, %v463
          %vm473 = vcmask 523264
          %v474 = vsel %vm473, %v472, %v466
          %vm475 = vcmask 785408
          %v476 = vsel %vm475, %v474, %v469
          %477 = vst [vmem:[#allocation5] sm:$0x1] %v476
          %v479 = vperm.slane %v457, 0
          %480 = vrot.lane.b32.xlu0 %v479, 32
          %v481 = vpop.permute.xlu0 %480
          %483 = vrot.lane.b32.xlu0 %v479, 64
          %v484 = vpop.permute.xlu0 %483
          %486 = vrot.lane.b32.xlu0 %v479, 96
          %v487 = vpop.permute.xlu0 %486
          %v489 = vsel %vm471, %v457, %v481
          %v490 = vsel %vm473, %v489, %v484
          %v491 = vsel %vm475, %v490, %v487
          %492 = vst [vmem:[#allocation6] sm:$0x1] %v491
          %493 = vst [vmem:[#allocation7] sm:$0x1] 0.0
        $region44: #{adjust_smooth_l1_loss.1} parent=35 // pred_fallthru
          _
        %p494 = scmp.ne.s32.totalorder %s24, 3
        %p495 = pnand %p309, %p494
        %p496 = pneg %p495
        // Predicated region
        $region45: #{adjust_smooth_l1_loss.1} parent=35 // pred_check
          _
        $region46: #{adjust_smooth_l1_loss.1} parent=35 // pred_check_branch
          %498 = sbr.rel (%p495) target = $region48
        $region47: #{adjust_smooth_l1_loss.1} parent=35 // pred_region
          %v499 = vld [vmem:[#allocation2] sm:$0x1]
          %v501 = vperm.slane %v499, 0
          %v503 = vsub.f32 %v319, %v501
          %v504 = vsub.f32 %v320, %v501
          %v505 = vld [vmem:[#allocation3] sm:$0x1]
          %v506 = vadd.f32 %v503, %v504
          %v507 = vrot.slane %v506, 4
          %v508 = vadd.f32 %v506, %v507
          %v509 = vrot.slane %v508, 2
          %v510 = vadd.f32 %v508, %v509
          %v511 = vrot.slane %v510, 1
          %v512 = vadd.f32 %v510, %v511
          %v513 = vadd.f32 %v505, %v512
          %514 = vst [vmem:[#allocation3] sm:$0x1] %v513
          %v515 = vld [vmem:[#allocation4] sm:$0x1]
          %v516 = vmul.f32 %v503, %v503
          %v517 = vmul.f32 %v504, %v504
          %v518 = vadd.f32 %v516, %v517
          %v519 = vrot.slane %v518, 4
          %v520 = vadd.f32 %v518, %v519
          %v521 = vrot.slane %v520, 2
          %v522 = vadd.f32 %v520, %v521
          %v523 = vrot.slane %v522, 1
          %v524 = vadd.f32 %v522, %v523
          %v525 = vadd.f32 %v515, %v524
          %526 = vst [vmem:[#allocation4] sm:$0x1] %v525
        $region48: #{adjust_smooth_l1_loss.1} parent=35 // pred_fallthru
          _
        %p527 = pnand %p309, %p312
        %p528 = pneg %p527
        // Predicated region
        $region49: #{adjust_smooth_l1_loss.1} parent=35 // pred_check
          _
        $region50: #{adjust_smooth_l1_loss.1} parent=35 // pred_check_branch
          %530 = sbr.rel (%p527) target = $region52
        $region51: #{adjust_smooth_l1_loss.1} parent=35 // pred_region
          %v531 = vld [vmem:[#allocation2] sm:$0x1]
          %v533 = vperm.slane %v531, 0
          %v535 = vsub.f32 %v319, %v533
          %v536 = vsub.f32 %v320, %v533
          %v537 = vsel %vm328, 1, 0
          %v538 = vsel %vm329, 1, 0
          %vm539 = vcmp.eq.s32.totalorder %v537, 1
          %vm540 = vcmp.eq.s32.totalorder %v538, 1
          %v541 = vsel %vm539, %v535, 0.0
          %v542 = vsel %vm540, %v536, 0.0
          %v543 = vld [vmem:[#allocation3] sm:$0x1]
          %v544 = vadd.f32 %v541, %v542
          %v545 = vrot.slane %v544, 4
          %v546 = vadd.f32 %v544, %v545
          %v547 = vrot.slane %v546, 2
          %v548 = vadd.f32 %v546, %v547
          %v549 = vrot.slane %v548, 1
          %v550 = vadd.f32 %v548, %v549
          %v551 = vadd.f32 %v543, %v550
          %552 = vst [vmem:[#allocation3] sm:$0x1] %v551
          %v553 = vld [vmem:[#allocation4] sm:$0x1]
          %v554 = vmul.f32 %v541, %v541
          %v555 = vmul.f32 %v542, %v542
          %v556 = vadd.f32 %v554, %v555
          %v557 = vrot.slane %v556, 4
          %v558 = vadd.f32 %v556, %v557
          %v559 = vrot.slane %v558, 2
          %v560 = vadd.f32 %v558, %v559
          %v561 = vrot.slane %v560, 1
          %v562 = vadd.f32 %v560, %v561
          %v563 = vadd.f32 %v553, %v562
          %564 = vst [vmem:[#allocation4] sm:$0x1] %v563
        $region52: #{adjust_smooth_l1_loss.1} parent=35 // pred_fallthru
          _
        %p565 = pnand %p310, %p494
        %p566 = pneg %p565
        // Predicated region
        $region53: #{adjust_smooth_l1_loss.1} parent=35 // pred_check
          _
        $region54: #{adjust_smooth_l1_loss.1} parent=35 // pred_check_branch
          %568 = sbr.rel (%p565) target = $region56
        $region55: #{adjust_smooth_l1_loss.1} parent=35 // pred_region
          %v569 = vld [vmem:[#allocation5] sm:$0x1]
          %v570 = vld [vmem:[#allocation6] sm:$0x1]
          %v572 = vperm.slane %v569, 0
          %vm574 = vcmp.lt.f32.partialorder %v319, %v572
          %vm575 = vcmp.lt.f32.partialorder %v320, %v572
          %v576 = vmul.f32 %v319, %v319
          %v577 = vmul.f32 %v320, %v320
          %v578 = vmul.f32 %v576, 0.5
          %v579 = vmul.f32 %v577, 0.5
          %v581 = vperm.slane %v570, 0
          %v583 = vmul.f32 %v578, %v581
          %v584 = vmul.f32 %v579, %v581
          %v585 = vmul.f32 %v569, 0.5
          %v587 = vperm.slane %v585, 0
          %v589 = vsub.f32 %v319, %v587
          %v590 = vsub.f32 %v320, %v587
          %v591 = vsel %vm574, %v583, %v589
          %v592 = vsel %vm575, %v584, %v590
          %v593 = vld [vmem:[#allocation7] sm:$0x1]
          %v594 = vadd.f32 %v591, %v592
          %v595 = vrot.slane %v594, 4
          %v596 = vadd.f32 %v594, %v595
          %v597 = vrot.slane %v596, 2
          %v598 = vadd.f32 %v596, %v597
          %v599 = vrot.slane %v598, 1
          %v600 = vadd.f32 %v598, %v599
          %v601 = vadd.f32 %v593, %v600
          %602 = vst [vmem:[#allocation7] sm:$0x1] %v601
        $region56: #{adjust_smooth_l1_loss.1} parent=35 // pred_fallthru
          _
        %p603 = pnand %p310, %p312
        %p604 = pneg %p603
        // Predicated region
        $region57: #{adjust_smooth_l1_loss.1} parent=35 // pred_check
          _
        $region58: #{adjust_smooth_l1_loss.1} parent=35 // pred_check_branch
          %606 = sbr.rel (%p603) target = $region60
        $region59: #{adjust_smooth_l1_loss.1} parent=35 // pred_region
          %v607 = vld [vmem:[#allocation5] sm:$0x1]
          %v608 = vld [vmem:[#allocation6] sm:$0x1]
          %v610 = vperm.slane %v607, 0
          %vm612 = vcmp.lt.f32.partialorder %v319, %v610
          %vm613 = vcmp.lt.f32.partialorder %v320, %v610
          %v614 = vmul.f32 %v319, %v319
          %v615 = vmul.f32 %v320, %v320
          %v616 = vmul.f32 %v614, 0.5
          %v617 = vmul.f32 %v615, 0.5
          %v619 = vperm.slane %v608, 0
          %v621 = vmul.f32 %v616, %v619
          %v622 = vmul.f32 %v617, %v619
          %v623 = vmul.f32 %v607, 0.5
          %v625 = vperm.slane %v623, 0
          %v627 = vsub.f32 %v319, %v625
          %v628 = vsub.f32 %v320, %v625
          %v629 = vsel %vm612, %v621, %v627
          %v630 = vsel %vm613, %v622, %v628
          %v631 = vsel %vm328, 1, 0
          %v632 = vsel %vm329, 1, 0
          %vm633 = vcmp.eq.s32.totalorder %v631, 1
          %vm634 = vcmp.eq.s32.totalorder %v632, 1
          %v635 = vsel %vm633, %v629, 0.0
          %v636 = vsel %vm634, %v630, 0.0
          %v637 = vld [vmem:[#allocation7] sm:$0x1]
          %v638 = vadd.f32 %v635, %v636
          %v639 = vrot.slane %v638, 4
          %v640 = vadd.f32 %v638, %v639
          %v641 = vrot.slane %v640, 2
          %v642 = vadd.f32 %v640, %v641
          %v643 = vrot.slane %v642, 1
          %v644 = vadd.f32 %v642, %v643
          %v645 = vadd.f32 %v637, %v644
          %646 = vst [vmem:[#allocation7] sm:$0x1] %v645
          %v647 = vld [vmem:[#allocation7] sm:$0x1]
          %vm648 = vcmask 1040384
          %v649 = vsel %vm648, %v647, 0.0
          %650 = vadd.xlane.f32.xlu0 %v649
          %v651 = vpop.xlane.xlu0 %650
          %v652 = vrot.slane %v651, 4
          %v653 = vadd.f32 %v651, %v652
          %v654 = vrot.slane %v653, 2
          %v655 = vadd.f32 %v653, %v654
          %v656 = vrot.slane %v655, 1
          %v657 = vadd.f32 %v655, %v656
          %s658 = vtos %v657
          %s659 = smul.f32 %s658, 0.00015625
          %s660 = scalar_lea.smem [#allocation8], 0
          %661 = sst [smem:[%s660]] %s659
        $region60: #{adjust_smooth_l1_loss.1} parent=35 // pred_fallthru
          _
        // Predicated region
        $region61: #{adjust_smooth_l1_loss.1} parent=35 // pred_check
          %p662 = pneg %p138
        $region62: #{adjust_smooth_l1_loss.1} parent=35 // pred_check_branch
          %664 = sbr.rel (%p662) target = $region64
        $region63: #{adjust_smooth_l1_loss.1} parent=35 // pred_region
          %666 = vsyncadd [#allocation9], 0
          %s668 = sshll.u32 %s4, 4
          %s669 = int_to_ptr.hbm [resolvable:$true] %s668
          %671 = dma.smem_to_hbm [#allocation8], 16, %s669, [#allocation9]
        $region64: #{adjust_smooth_l1_loss.1} parent=35 // pred_fallthru
          _
        // Predicated region
        $region65: #{adjust_smooth_l1_loss.1} parent=35 // pred_check
          %p672 = pneg %p159
        $region66: #{adjust_smooth_l1_loss.1} parent=35 // pred_check_branch
          %674 = sbr.rel (%p672) target = $region68
        $region67: #{adjust_smooth_l1_loss.1} parent=35 // pred_region
          _
        $region68: #{adjust_smooth_l1_loss.1} parent=35 // pred_fallthru
          _
        // Predicated region
        $region69: #{adjust_smooth_l1_loss.1} parent=35 // pred_check
          %p675 = pneg %p180
        $region70: #{adjust_smooth_l1_loss.1} parent=35 // pred_check_branch
          %677 = sbr.rel (%p675) target = $region72
        $region71: #{adjust_smooth_l1_loss.1} parent=35 // pred_region
          _
        $region72: #{adjust_smooth_l1_loss.1} parent=35 // pred_fallthru
          _
        // Predicated region
        $region73: #{adjust_smooth_l1_loss.1} parent=35 // pred_check
          %p678 = pneg %p138
        $region74: #{adjust_smooth_l1_loss.1} parent=35 // pred_check_branch
          %680 = sbr.rel (%p678) target = $region76
        $region75: #{adjust_smooth_l1_loss.1} parent=35 // pred_region
          %682 = dma.done [#allocation9], 16
        $region76: #{adjust_smooth_l1_loss.1} parent=35 // pred_fallthru
          _
        // Predicated region
        $region77: #{adjust_smooth_l1_loss.1} parent=35 // pred_check
          %p683 = pneg %p159
        $region78: #{adjust_smooth_l1_loss.1} parent=35 // pred_check_branch
          %685 = sbr.rel (%p683) target = $region80
        $region79: #{adjust_smooth_l1_loss.1} parent=35 // pred_region
          _
        $region80: #{adjust_smooth_l1_loss.1} parent=35 // pred_fallthru
          _
        // Predicated region
        $region81: #{adjust_smooth_l1_loss.1} parent=35 // pred_check
          %p686 = pneg %p180
        $region82: #{adjust_smooth_l1_loss.1} parent=35 // pred_check_branch
          %688 = sbr.rel (%p686) target = $region84
        $region83: #{adjust_smooth_l1_loss.1} parent=35 // pred_region
          _
        $region84: #{adjust_smooth_l1_loss.1} parent=35 // pred_fallthru
          _
        %689 = sfence
      $region36: #{adjust_smooth_l1_loss.1} parent=5 // pred_fallthru
        _
      %p690 = scmp.le.s32.totalorder 2, %s14
      // Predicated region
      $region85: #{adjust_smooth_l1_loss.1} parent=5 // pred_check
        %p691 = pneg %p690
      $region86: #{adjust_smooth_l1_loss.1} parent=5 // pred_check_branch
        %693 = sbr.rel (%p691) target = $region88
      $region87: #{adjust_smooth_l1_loss.1} parent=5 // pred_region
        %s694 = ssub.s32 %s14, 2
      $region88: #{adjust_smooth_l1_loss.1} parent=5 // pred_fallthru
        _
    $region6: #{adjust_smooth_l1_loss.1} parent=1 // loop_footer
      %s18 = sadd.s32 1, %s14
    $region7: #{adjust_smooth_l1_loss.1} parent=1 // loop_footer_branch
      %13 = sbr.rel target = $region3
    $region8: #{adjust_smooth_l1_loss.1} parent=1 // loop_exit
      _
    %695 = vsyncpa [#allocation9], 1
    %s696 = scalar_lea.sflag [#allocation9], 1
    %697 = vsyncpa %s696, 1

</llo_original>
